<compile_context>
chip_gen: v7x
topology: tpu7x:2x2x1
jax: 0.10.0
libtpu: 0.0.40
codegen_flags: <defaults>
</compile_context>

<pallas_src>
import math

import jax
import jax.numpy as jnp
from jax.experimental import pallas as pl
from jax.experimental.pallas import tpu as pltpu


def identity(x: jax.Array) -> jax.Array:
    """Identity.forward(x) -> x.  No copy, no HBM traffic (module-faithful)."""
    return x


def _identity_copy_kernel(x_hbm, o_hbm, sem):
    # One HBM->HBM DMA of the whole array: no VMEM staging, no vld/vst work,
    # no per-grid-step overhead; runs at full HBM bandwidth on v5e/v6e/v7x.
    cp = pltpu.make_async_copy(x_hbm, o_hbm, sem)
    cp.start()
    cp.wait()


@jax.jit
def identity_copy(x: jax.Array) -> jax.Array:
    """Materialized copy of x via a single-DMA Pallas kernel.

    Use only when a fresh buffer is genuinely required; otherwise call
    `identity()` which is free.
    """
    orig_shape = x.shape
    total = math.prod(orig_shape) if orig_shape else 1
    if total == 0:
        return x  # nothing to copy

    # DMA wants at least a 1-D ref; scalars are viewed as (1,).
    x_flat = x if x.ndim >= 1 else x.reshape(1)

    out = pl.pallas_call(
        _identity_copy_kernel,
        out_shape=jax.ShapeDtypeStruct(x_flat.shape, x_flat.dtype),
        in_specs=[pl.BlockSpec(memory_space=pl.ANY)],   # stay in HBM, no auto-DMA
        out_specs=pl.BlockSpec(memory_space=pl.ANY),    # stay in HBM, no auto-DMA
        scratch_shapes=[pltpu.SemaphoreType.DMA(())],
        cost_estimate=pl.CostEstimate(
            flops=0,
            transcendentals=0,
            bytes_accessed=2 * total * x.dtype.itemsize,
        ),
    )(x_flat)

    return out.reshape(orig_shape)


if __name__ == "__main__":
    key = jax.random.PRNGKey(0)
    # NCHW input, small shapes: batch=2, channels=4, H=W=16
    x = jax.random.normal(key, (2, 4, 16, 16), dtype=jnp.float32)

    # Module-faithful forward: zero-cost identity.
    y = identity(x)
    y = jax.block_until_ready(y)

    # Run the Pallas copy kernel once (materialized-copy path).
    y_copy = identity_copy(x)
    y_copy = jax.block_until_ready(y_copy)

    assert y.shape == x.shape and y.dtype == x.dtype, (y.shape, y.dtype)
    assert bool(jnp.array_equal(y, x)), "identity output mismatch"
    assert y_copy.shape == x.shape and y_copy.dtype == x.dtype, (y_copy.shape, y_copy.dtype)
    assert bool(jnp.array_equal(y_copy, x)), "identity_copy kernel output mismatch"

    print("KERNEL_OK")
</pallas_src>

<mosaic_0001>
module attributes {stable_mosaic.version = 11 : i64} {
  func.func @_identity_copy_kernel(%arg0: memref<2x4x16x16xf32, #tpu.memory_space<any>>, %arg1: memref<2x4x16x16xf32, #tpu.memory_space<any>>, %arg2: memref<!tpu.dma_semaphore, #tpu.memory_space<semaphore_mem>>) attributes {dimension_semantics = [], scalar_prefetch = 0 : i64, scratch_operands = 1 : i64, tpu.core_type = #tpu.core_type<tc>} {
    tpu.enqueue_dma source(%arg0 : memref<2x4x16x16xf32, #tpu.memory_space<any>>) target(%arg1 : memref<2x4x16x16xf32, #tpu.memory_space<any>>) target_semaphore(%arg2 : memref<!tpu.dma_semaphore, #tpu.memory_space<semaphore_mem>>)
    tpu.wait_dma2 semaphore(%arg2 : memref<!tpu.dma_semaphore, #tpu.memory_space<semaphore_mem>>) src(%arg0 : memref<2x4x16x16xf32, #tpu.memory_space<any>>) dst(%arg1 : memref<2x4x16x16xf32, #tpu.memory_space<any>>)
    return
  }
}

</mosaic_0001>

<llo_original>
// kernel: identity_copy.1
$region0: #{identity_copy.1}
  #allocation0 [shape = 'u32[]', space=smem, size = 0x4, offset = 0x4, fixed_abs, tag = 'smem constant byte address 0x4 - core index']
  #allocation1 [shape = 'u32[144,128]{1,0:T(1,128)}', space=vmem, size = 0x12000, scoped, tag = 'internal scratch']
  #allocation2 [shape = 's32[1]{0}', space=sflag, size = 0x4, scoped, tag = 'scratch operand']
  #allocation3 [shape = 's32[]', space=sflag, size = 0x4, offset = 0, fixed_abs, tag = 'sflag constant byte address 0x0 - dummy sync flag']
  #allocation4 [shape = 'u32[0]{0}', space=smem, size = 0, offset = 0, fixed_abs, tag = 'smem constant byte address 0x0 - null']
  %s0 = inlined_call_operand.hbm [shape: f32[2,4,16,16], index: 0, kind: input, shape index: {}]
  %s1 = inlined_call_operand.hbm [shape: f32[2,4,16,16], index: 1, kind: output, shape index: {}]
  %s2 = sld [smem:[#allocation0]]
  $region2: #{identity_copy.1} parent=0
    _
  %s4 = ssub.s32 1, %s2
  %s5 = scalar_select 0, %s4, %s2
  %s7 = sshll.u32 1, 14
  %s8 = sxor.u32 4294967295, %s7
  %s11 = sshll.u32 3, 24
  %s12 = sxor.u32 4294967295, %s11
  %s13 = sand.u32 0, %s12
  %s15 = sor.u32 %s13, 0
  %18 = dma.general %s0, 2048, %s1, [#allocation2], [#allocation3], [#allocation4], %s15, 0
  %s19 = smul.u32 2, 4
  %s20 = smul.u32 %s19, 16
  %s21 = smul.u32 %s20, 1
  %s22 = sshll.u32 %s21, 4
  %23 = dma.done [#allocation2], %s22
  %24 = vsyncmov [#allocation2]
  %s25 = vpop.sfrf %24
  %p26 = scmp.eq.s32.totalorder %s25, 0
  %p27 = pneg %p26
  %29 = shalt.err (%p27)

</llo_original>
